<compile_context>
chip_gen: v7x
topology: tpu7x:2x2x1
jax: 0.10.0
libtpu: 0.0.40
codegen_flags: <defaults>
</compile_context>

<pallas_src>
import functools

import jax
import jax.numpy as jnp
from jax.experimental import pallas as pl
from jax.experimental.pallas import tpu as pltpu

_LANE = 128
_TARGET_VMEM_EST_BYTES = 32 << 20   # target estimated per-core VMEM footprint
_F32_TEMP_FACTOR = 8                # allowance (in f32 tile copies) for intermediates


def _round_up(x, m):
    return ((x + m - 1) // m) * m


def _sublane_unit(itemsize):
    # Native sublane packing: f32 -> 8 rows, bf16 -> 16 rows, int8/fp8 -> 32 rows.
    return max(8, 32 // int(itemsize))


def _vmem_cap_bytes():
    """Generation-aware ceiling for vmem_limit_bytes (per TensorCore)."""
    try:
        info = pltpu.get_tpu_info()
        phys = int(getattr(info, "vmem_capacity_bytes", 0) or 0)
        if phys > 0:
            return (phys * 3) // 4          # ~96 MiB on v5e/v6e, ~48 MiB on v7x
    except Exception:
        pass
    return 48 << 20                         # safe on v5e/v6e (128 MiB) and v7x (64 MiB/TC)


def _estimate_vmem_bytes(tb, c_pad, s_item, t_item):
    in_bufs = 2 * tb * c_pad * (s_item + t_item)       # 2 pipeline buffers per input
    temps = _F32_TEMP_FACTOR * tb * c_pad * 4           # f32 tile-sized intermediates
    misc = c_pad * 4 + 4 * 8 * _LANE * 4 + (1 << 20)    # accumulator + out blocks + slack
    return in_bufs + temps + misc


def _pick_block_b(B, C, s_item, t_item):
    """Byte-budgeted batch tile (rows), rounded to the native sublane multiple."""
    sub = _sublane_unit(min(s_item, t_item))
    c_pad = _round_up(C, _LANE)              # VMEM lane padding
    per_row = 2 * c_pad * (s_item + t_item) + _F32_TEMP_FACTOR * c_pad * 4
    tb = _TARGET_VMEM_EST_BYTES // max(per_row, 1)
    tb = max((tb // sub) * sub, sub)
    if tb >= B:
        return B                             # single block == full array: no padding/mask
    return tb


def _distill_kernel(s_ref, t_ref, o_ref, acc_ref, *,
                    inv_temp, inv_batch, batch, block_b, tiles_per_core,
                    need_mask, approx_recip):
    c = pl.program_id(0)          # parallel (per-TensorCore) axis
    j = pl.program_id(1)          # sequential batch-tile reduction axis

    @pl.when(j == 0)
    def _init():
        acc_ref[...] = jnp.zeros_like(acc_ref)

    # Load (TB, C) tiles, upcast to f32, fold the temperature divide into one multiply.
    s = s_ref[...].astype(jnp.float32) * inv_temp
    t = t_ref[...].astype(jnp.float32) * inv_temp

    # Student softmax over the class (lane) axis.
    s_max = jnp.max(s, axis=1, keepdims=True)
    s_exp = jnp.exp(s - s_max)
    s_sum = jnp.sum(s_exp, axis=1, keepdims=True)
    s_probs = s_exp * pl.reciprocal(s_sum, approx=approx_recip)

    # Teacher softmax + numerically stable log-softmax.
    t_max = jnp.max(t, axis=1, keepdims=True)
    t_shift = t - t_max
    t_exp = jnp.exp(t_shift)
    t_sum = jnp.sum(t_exp, axis=1, keepdims=True)
    t_probs = t_exp * pl.reciprocal(t_sum, approx=approx_recip)
    log_t_probs = t_shift - jnp.log(t_sum)

    # KLDivLoss pointwise term with raw (non-log) student probabilities, matching the
    # PyTorch module's (deliberately reproduced) use of KLDivLoss.
    kl = t_probs * (log_t_probs - s_probs)

    def _accumulate(x):
        # Row-axis reduce (vreg adds + one sublane reduce) into a VMEM vector accumulator;
        # no per-tile vector->SMEM scalar round trip.
        acc_ref[...] += jnp.sum(x, axis=0, keepdims=True)

    if need_mask:
        tile = c * tiles_per_core + j              # logical (unclamped) batch-tile index
        is_tail = (tile + 1) * block_b > batch     # only boundary / padded-slot tiles

        @pl.when(is_tail)
        def _masked():
            rows = tile * block_b + jax.lax.broadcasted_iota(jnp.int32, kl.shape, 0)
            _accumulate(jnp.where(rows < batch, kl, 0.0))

        @pl.when(jnp.logical_not(is_tail))
        def _unmasked():
            _accumulate(kl)
    else:
        _accumulate(kl)

    @pl.when(j == pl.num_programs(1) - 1)
    def _finalize():
        total = jnp.sum(acc_ref[...]) * inv_batch
        o_ref[...] = jnp.full(o_ref.shape, total, dtype=o_ref.dtype)


def distillation_loss(student_logits, teacher_logits, temperature=3.0, block_b=None,
                      approx_reciprocal=False, downcast_to_bf16=False):
    assert student_logits.shape == teacher_logits.shape
    assert student_logits.ndim == 2

    if downcast_to_bf16:
        # Explicit accuracy-policy opt-in: halves HBM traffic for this mem-bound kernel.
        student_logits = student_logits.astype(jnp.bfloat16)
        teacher_logits = teacher_logits.astype(jnp.bfloat16)

    B, C = student_logits.shape
    s_item = jnp.dtype(student_logits.dtype).itemsize
    t_item = jnp.dtype(teacher_logits.dtype).itemsize
    sub = _sublane_unit(min(s_item, t_item))

    if block_b is None:
        tb = _pick_block_b(B, C, s_item, t_item)
    else:
        tb = _round_up(int(block_b), sub)
        if tb >= B:
            tb = B

    num_tiles = pl.cdiv(B, tb)
    # Batch-tile sharding across v7x's 2 TensorCores; runs serially (harmless) on v5e/v6e.
    nc = 2 if num_tiles >= 2 else 1
    tiles_per_core = pl.cdiv(num_tiles, nc)
    need_mask = (B % tb != 0) or (nc * tiles_per_core != num_tiles)
    last_tile = num_tiles - 1

    def in_index(ci, ji):
        tile = ci * tiles_per_core + ji
        # Clamp padded slots (odd tile counts) onto the last real tile so the DMA never
        # goes out of bounds; those slots are fully masked in the kernel.
        return (jnp.minimum(tile, last_tile), 0)

    c_pad = _round_up(C, _LANE)
    est = _estimate_vmem_bytes(tb, c_pad, s_item, t_item)
    vmem_limit = int(min(_vmem_cap_bytes(), max(est + (8 << 20), 32 << 20)))

    cost = pl.CostEstimate(
        flops=int(12 * B * C),
        transcendentals=int(2 * B * C),
        bytes_accessed=int(B * C * (s_item + t_item) + nc * 8 * _LANE * 4),
    )

    kernel = functools.partial(
        _distill_kernel,
        inv_temp=1.0 / float(temperature),
        inv_batch=1.0 / float(B),
        batch=B,
        block_b=tb,
        tiles_per_core=tiles_per_core,
        need_mask=need_mask,
        approx_recip=bool(approx_reciprocal),
    )

    out = pl.pallas_call(
        kernel,
        out_shape=jax.ShapeDtypeStruct((nc * 8, _LANE), jnp.float32),
        grid=(nc, tiles_per_core),
        in_specs=[
            pl.BlockSpec((tb, C), in_index),
            pl.BlockSpec((tb, C), in_index),
        ],
        out_specs=pl.BlockSpec((8, _LANE), lambda ci, ji: (ci, 0)),
        scratch_shapes=[pltpu.VMEM((1, C), jnp.float32)],
        compiler_params=pltpu.CompilerParams(
            dimension_semantics=("parallel", "arbitrary"),
            vmem_limit_bytes=vmem_limit,
        ),
        cost_estimate=cost,
    )(student_logits, teacher_logits)

    # Each core's (8,128) block holds its partial loss (already divided by B) broadcast.
    return jnp.sum(out[::8, 0])


if __name__ == "__main__":
    key = jax.random.PRNGKey(0)
    ks = jax.random.split(key, 6)

    def ref_loss(student, teacher, temperature):
        s = student.astype(jnp.float32) / temperature
        t = teacher.astype(jnp.float32) / temperature
        sp = jax.nn.softmax(s, axis=1)
        tp = jax.nn.softmax(t, axis=1)
        return jnp.sum(tp * (jnp.log(tp) - sp)) / student.shape[0]

    # 1) Tail-masked 2-tile case -> grid (2, 1): parallel core axis + last-tile mask.
    B, C = 13, 32
    s1 = jax.random.normal(ks[0], (B, C), dtype=jnp.float32)
    t1 = jax.random.normal(ks[1], (B, C), dtype=jnp.float32)
    out1 = distillation_loss(s1, t1, temperature=3.0, block_b=8)
    jax.block_until_ready(out1)
    r1 = ref_loss(s1, t1, 3.0)
    assert jnp.allclose(out1, r1, atol=1e-5, rtol=1e-5), (out1, r1)

    # 2) Odd tile count (3 tiles on 2 cores): exercises the clamped, fully-masked extra slot.
    B, C = 48, 160
    s2 = jax.random.normal(ks[2], (B, C), dtype=jnp.float32)
    t2 = jax.random.normal(ks[3], (B, C), dtype=jnp.float32)
    out2 = distillation_loss(s2, t2, temperature=3.0, block_b=16)
    jax.block_until_ready(out2)
    r2 = ref_loss(s2, t2, 3.0)
    assert jnp.allclose(out2, r2, atol=1e-5, rtol=1e-5), (out2, r2)

    # 3) Auto byte-budgeted tiling (single full-array block, no masking).
    out3 = distillation_loss(s1, t1, temperature=3.0)
    jax.block_until_ready(out3)
    assert jnp.allclose(out3, r1, atol=1e-5, rtol=1e-5), (out3, r1)

    # 4) bf16 inputs with 16-row sublane tiles and a tail mask.
    B, C = 24, 256
    s4 = jax.random.normal(ks[4], (B, C), dtype=jnp.float32).astype(jnp.bfloat16)
    t4 = jax.random.normal(ks[5], (B, C), dtype=jnp.float32).astype(jnp.bfloat16)
    out4 = distillation_loss(s4, t4, temperature=3, block_b=16)
    jax.block_until_ready(out4)
    r4 = ref_loss(s4, t4, 3.0)
    assert jnp.allclose(out4, r4, atol=1e-5, rtol=1e-5), (out4, r4)

    print("KERNEL_OK")
</pallas_src>

<mosaic_0001>
module attributes {stable_mosaic.version = 11 : i64} {
  func.func @_distill_kernel(%arg0: i32, %arg1: i32, %arg2: memref<8x32xf32, #tpu.memory_space<vmem>>, %arg3: memref<8x32xf32, #tpu.memory_space<vmem>>, %arg4: memref<8x128xf32, #tpu.memory_space<vmem>>, %arg5: memref<1x32xf32, #tpu.memory_space<vmem>>) attributes {dimension_semantics = [#tpu.dimension_semantics<parallel>, #tpu.dimension_semantics<arbitrary>], iteration_bounds = array<i64: 2, 1>, scalar_prefetch = 0 : i64, scratch_operands = 1 : i64, tpu.core_type = #tpu.core_type<tc>, window_params = [{transform_indices = @transform_0, window_bounds = array<i64: 8, 32>}, {transform_indices = @transform_1, window_bounds = array<i64: 8, 32>}, {transform_indices = @transform_2, window_bounds = array<i64: 8, 128>}]} {
    %c0_i32 = arith.constant 0 : i32
    %0 = arith.cmpi eq, %arg1, %c0_i32 : i32
    %1 = arith.extui %0 : i1 to i32
    %c0_i32_0 = arith.constant 0 : i32
    %2 = arith.cmpi ne, %1, %c0_i32_0 : i32
    scf.if %2 {
      %cst_14 = arith.constant 0.000000e+00 : f32
      %47 = vector.broadcast %cst_14 : f32 to vector<1x32xf32>
      %c0_15 = arith.constant 0 : index
      %c0_16 = arith.constant 0 : index
      %48 = vector.load %arg5[%c0_15, %c0_16] : memref<1x32xf32, #tpu.memory_space<vmem>>, vector<1x32xf32>
      tpu.vector_store %arg5[%c0_15, %c0_16], %47 {strides = array<i32>} : memref<1x32xf32, #tpu.memory_space<vmem>>, vector<1x32xf32>,
    } else {
    }
    %c0 = arith.constant 0 : index
    %c0_1 = arith.constant 0 : index
    %3 = vector.load %arg2[%c0, %c0_1] : memref<8x32xf32, #tpu.memory_space<vmem>>, vector<8x32xf32>
    %cst = arith.constant 0.333333343 : f32
    %4 = vector.broadcast %cst : f32 to vector<8x32xf32>
    %5 = arith.mulf %3, %4 : vector<8x32xf32>
    %c0_2 = arith.constant 0 : index
    %c0_3 = arith.constant 0 : index
    %6 = vector.load %arg3[%c0_2, %c0_3] : memref<8x32xf32, #tpu.memory_space<vmem>>, vector<8x32xf32>
    %cst_4 = arith.constant 0.333333343 : f32
    %7 = vector.broadcast %cst_4 : f32 to vector<8x32xf32>
    %8 = arith.mulf %6, %7 : vector<8x32xf32>
    %cst_5 = arith.constant dense<0xFF800000> : vector<8xf32>
    %9 = vector.multi_reduction <maximumf>, %5, %cst_5 [1] : vector<8x32xf32> to vector<8xf32>
    %10 = vector.shape_cast %9 : vector<8xf32> to vector<8x1xf32>
    %11 = vector.broadcast %10 : vector<8x1xf32> to vector<8x32xf32>
    %12 = arith.subf %5, %11 : vector<8x32xf32>
    %13 = math.exp %12 : vector<8x32xf32>
    %cst_6 = arith.constant dense<0.000000e+00> : vector<8xf32>
    %14 = vector.multi_reduction <add>, %13, %cst_6 [1] : vector<8x32xf32> to vector<8xf32>
    %15 = vector.shape_cast %14 : vector<8xf32> to vector<8x1xf32>
    %16 = tpu.reciprocal %15 : vector<8x1xf32> -> vector<8x1xf32>
    %17 = vector.broadcast %16 : vector<8x1xf32> to vector<8x32xf32>
    %18 = arith.mulf %13, %17 : vector<8x32xf32>
    %cst_7 = arith.constant dense<0xFF800000> : vector<8xf32>
    %19 = vector.multi_reduction <maximumf>, %8, %cst_7 [1] : vector<8x32xf32> to vector<8xf32>
    %20 = vector.shape_cast %19 : vector<8xf32> to vector<8x1xf32>
    %21 = vector.broadcast %20 : vector<8x1xf32> to vector<8x32xf32>
    %22 = arith.subf %8, %21 : vector<8x32xf32>
    %23 = math.exp %22 : vector<8x32xf32>
    %cst_8 = arith.constant dense<0.000000e+00> : vector<8xf32>
    %24 = vector.multi_reduction <add>, %23, %cst_8 [1] : vector<8x32xf32> to vector<8xf32>
    %25 = vector.shape_cast %24 : vector<8xf32> to vector<8x1xf32>
    %26 = tpu.reciprocal %25 : vector<8x1xf32> -> vector<8x1xf32>
    %27 = vector.broadcast %26 : vector<8x1xf32> to vector<8x32xf32>
    %28 = arith.mulf %23, %27 : vector<8x32xf32>
    %29 = math.log %25 : vector<8x1xf32>
    %30 = vector.broadcast %29 : vector<8x1xf32> to vector<8x32xf32>
    %31 = arith.subf %22, %30 : vector<8x32xf32>
    %32 = arith.subf %31, %18 : vector<8x32xf32>
    %33 = arith.mulf %28, %32 : vector<8x32xf32>
    %c1_i32 = arith.constant 1 : i32
    %34 = arith.muli %arg0, %c1_i32 : i32
    %35 = arith.addi %34, %arg1 : i32
    %c1_i32_9 = arith.constant 1 : i32
    %36 = arith.addi %35, %c1_i32_9 : i32
    %c8_i32 = arith.constant 8 : i32
    %37 = arith.muli %36, %c8_i32 : i32
    %c13_i32 = arith.constant 13 : i32
    %38 = arith.cmpi sgt, %37, %c13_i32 : i32
    %39 = arith.extui %38 : i1 to i32
    %c0_i32_10 = arith.constant 0 : i32
    %40 = arith.cmpi ne, %39, %c0_i32_10 : i32
    scf.if %40 {
      %c8_i32_14 = arith.constant 8 : i32
      %47 = arith.muli %35, %c8_i32_14 : i32
      %48 = tpu.iota {dimensions = array<i32: 0>} : vector<8x32xi32>
      %49 = vector.broadcast %47 : i32 to vector<8x32xi32>
      %50 = arith.addi %49, %48 : vector<8x32xi32>
      %c13_i32_15 = arith.constant 13 : i32
      %51 = vector.broadcast %c13_i32_15 : i32 to vector<8x32xi32>
      %52 = arith.cmpi slt, %50, %51 : vector<8x32xi32>
      %cst_16 = arith.constant 0.000000e+00 : f32
      %53 = vector.broadcast %cst_16 : f32 to vector<8x32xf32>
      %54 = arith.select %52, %33, %53 : vector<8x32xi1>, vector<8x32xf32>
      %c0_17 = arith.constant 0 : index
      %c0_18 = arith.constant 0 : index
      %55 = vector.load %arg5[%c0_17, %c0_18] : memref<1x32xf32, #tpu.memory_space<vmem>>, vector<1x32xf32>
      %cst_19 = arith.constant dense<0.000000e+00> : vector<32xf32>
      %56 = vector.multi_reduction <add>, %54, %cst_19 [0] : vector<8x32xf32> to vector<32xf32>
      %57 = vector.shape_cast %56 : vector<32xf32> to vector<1x32xf32>
      %58 = arith.addf %55, %57 : vector<1x32xf32>
      %c0_20 = arith.constant 0 : index
      %c0_21 = arith.constant 0 : index
      %59 = vector.load %arg5[%c0_20, %c0_21] : memref<1x32xf32, #tpu.memory_space<vmem>>, vector<1x32xf32>
      tpu.vector_store %arg5[%c0_20, %c0_21], %58 {strides = array<i32>} : memref<1x32xf32, #tpu.memory_space<vmem>>, vector<1x32xf32>,
    } else {
    }
    %true = arith.constant true
    %41 = arith.xori %38, %true : i1
    %42 = arith.extui %41 : i1 to i32
    %c0_i32_11 = arith.constant 0 : i32
    %43 = arith.cmpi ne, %42, %c0_i32_11 : i32
    scf.if %43 {
      %c0_14 = arith.constant 0 : index
      %c0_15 = arith.constant 0 : index
      %47 = vector.load %arg5[%c0_14, %c0_15] : memref<1x32xf32, #tpu.memory_space<vmem>>, vector<1x32xf32>
      %cst_16 = arith.constant dense<0.000000e+00> : vector<32xf32>
      %48 = vector.multi_reduction <add>, %33, %cst_16 [0] : vector<8x32xf32> to vector<32xf32>
      %49 = vector.shape_cast %48 : vector<32xf32> to vector<1x32xf32>
      %50 = arith.addf %47, %49 : vector<1x32xf32>
      %c0_17 = arith.constant 0 : index
      %c0_18 = arith.constant 0 : index
      %51 = vector.load %arg5[%c0_17, %c0_18] : memref<1x32xf32, #tpu.memory_space<vmem>>, vector<1x32xf32>
      tpu.vector_store %arg5[%c0_17, %c0_18], %50 {strides = array<i32>} : memref<1x32xf32, #tpu.memory_space<vmem>>, vector<1x32xf32>,
    } else {
    }
    %c0_i32_12 = arith.constant 0 : i32
    %44 = arith.cmpi eq, %arg1, %c0_i32_12 : i32
    %45 = arith.extui %44 : i1 to i32
    %c0_i32_13 = arith.constant 0 : i32
    %46 = arith.cmpi ne, %45, %c0_i32_13 : i32
    scf.if %46 {
      %c0_14 = arith.constant 0 : index
      %c0_15 = arith.constant 0 : index
      %47 = vector.load %arg5[%c0_14, %c0_15] : memref<1x32xf32, #tpu.memory_space<vmem>>, vector<1x32xf32>
      %48 = vector.shape_cast %47 : vector<1x32xf32> to vector<1x1x32xf32>
      %cst_16 = arith.constant dense<0.000000e+00> : vector<1xf32>
      %49 = vector.multi_reduction <add>, %48, %cst_16 [1, 2] : vector<1x1x32xf32> to vector<1xf32>
      %50 = vector.shape_cast %49 : vector<1xf32> to vector<1x1x1xf32>
      %51 = vector.extract %50[0, 0, 0] : f32 from vector<1x1x1xf32>
      %cst_17 = arith.constant 0.0769230798 : f32
      %52 = arith.mulf %51, %cst_17 : f32
      %53 = vector.broadcast %52 : f32 to vector<8x128xf32>
      %c0_18 = arith.constant 0 : index
      %c0_19 = arith.constant 0 : index
      %54 = vector.load %arg4[%c0_18, %c0_19] : memref<8x128xf32, #tpu.memory_space<vmem>>, vector<8x128xf32>
      tpu.vector_store %arg4[%c0_18, %c0_19], %53 {strides = array<i32>} : memref<8x128xf32, #tpu.memory_space<vmem>>, vector<8x128xf32>,
    } else {
    }
    return
  }
  func.func @transform_0(%arg0: i32, %arg1: i32) -> (i32, i32) {
    %c1_i32 = arith.constant 1 : i32
    %0 = arith.muli %arg0, %c1_i32 : i32
    %1 = arith.addi %0, %arg1 : i32
    %c1_i32_0 = arith.constant 1 : i32
    %2 = arith.minsi %1, %c1_i32_0 : i32
    %c0_i32 = arith.constant 0 : i32
    %c0_i32_1 = arith.constant 0 : i32
    return %2, %c0_i32 : i32, i32
  }
  func.func @transform_1(%arg0: i32, %arg1: i32) -> (i32, i32) {
    %c1_i32 = arith.constant 1 : i32
    %0 = arith.muli %arg0, %c1_i32 : i32
    %1 = arith.addi %0, %arg1 : i32
    %c1_i32_0 = arith.constant 1 : i32
    %2 = arith.minsi %1, %c1_i32_0 : i32
    %c0_i32 = arith.constant 0 : i32
    %c0_i32_1 = arith.constant 0 : i32
    return %2, %c0_i32 : i32, i32
  }
  func.func @transform_2(%arg0: i32, %arg1: i32) -> (i32, i32) {
    %c0_i32 = arith.constant 0 : i32
    %c0_i32_0 = arith.constant 0 : i32
    return %arg0, %c0_i32 : i32, i32
  }
}

</mosaic_0001>

<llo_original>
// kernel: tpu_custom_call.1
$region0: #{tpu_custom_call.1}
  #allocation0 [shape = 'u32[]', space=smem, size = 0x4, offset = 0x4, fixed_abs, tag = 'smem constant byte address 0x4 - core index']
  #allocation1 [shape = 'u32[144,128]{1,0:T(1,128)}', space=vmem, size = 0x12000, scoped, tag = 'internal scratch']
  #allocation2 [shape = 'f32[1,32]{1,0:T(1,128)}', space=vmem, size = 0x200, scoped, tag = 'scratch operand']
  %s0 = inlined_call_operand.hbm [shape: f32[13,32], index: 0, kind: input, shape index: {}]
  %s1 = inlined_call_operand.hbm [shape: f32[13,32], index: 1, kind: input, shape index: {}]
  %s2 = inlined_call_operand.hbm [shape: f32[16,128], index: 2, kind: output, shape index: {}]
  %s3 = sld [smem:[#allocation0]]
  $region65: #{tpu_custom_call.1} parent=0
    _
  %s5 = ssub.s32 1, %s3
  %s6 = scalar_select 0, %s5, %s3
  $region1: #{tpu_custom_call.1} parent=0
    #allocation3 [shape = 'u8[8192]{0}', space=vmem, size = 0x2000, scoped, tag = 'input window, operand 0']
    #allocation4 [shape = 's32[2]{0}', space=sflag, size = 0x8, scoped, tag = 'scoped memory for tpu_custom_call.1']
    #allocation5 [shape = 's32[2]{0}', space=sflag, size = 0x8, scoped, tag = 'scoped memory for tpu_custom_call.1']
    #allocation6 [shape = 'u8[8192]{0}', space=vmem, size = 0x2000, scoped, tag = 'input window, operand 1']
    #allocation7 [shape = 's32[2]{0}', space=sflag, size = 0x8, scoped, tag = 'scoped memory for tpu_custom_call.1']
    #allocation8 [shape = 'u8[8192]{0}', space=vmem, size = 0x2000, scoped, tag = 'output window, operand 0']
    %7 = vsyncpa [#allocation4], 0
    %s8 = scalar_lea.sflag [#allocation4], 1
    %9 = vsyncpa %s8, 0
    %10 = vsyncpa [#allocation7], 0
    %s11 = scalar_lea.sflag [#allocation7], 1
    %12 = vsyncpa %s11, 0
    %13 = vsyncpa [#allocation5], 0
    %s14 = scalar_lea.sflag [#allocation5], 1
    %15 = vsyncpa %s14, 0
    loop: start=0, step=1, limit=4
    $region2: #{tpu_custom_call.1} parent=1 // loop_pre_header
      _
    $region3: #{tpu_custom_call.1} parent=1 // loop_header
      %s17 = sphi 0, %s21
      %p18 = scmp.ge.s32.totalorder %s17, 4
      %s24 = sphi 0, %s36
      %s25 = sphi 0, %s32
      %s26 = sphi 0, %s24
      %s27 = sphi 0, %s25
      %s28 = sphi 0, %s26
      %s29 = sphi 0, %s27
      %s45 = sphi 0, %s47
      %s48 = sphi 0, %s45
      %s49 = sphi 0, %s48
      %s65 = sphi 0, %s49
      %s77 = sphi 0, %s79
      %s80 = sphi 0, %s77
      %s81 = sphi 0, %s80
      %s97 = sphi 0, %s81
      %s103 = sphi 0, %s105
      %s106 = sphi 0, %s103
      %s107 = sphi 0, %s106
      %s123 = sphi 0, %s107
    $region4: #{tpu_custom_call.1} parent=1 // loop_header_branch
      %20 = sbr.rel (%p18) target = $region8
    $region5: #{tpu_custom_call.1} parent=1 // loop_body
      %s22 = ssub.s32 %s17, 1
      %s23 = ssub.s32 %s17, 2
      %s30 = sadd.s32 1, %s25
      %p31 = scmp.ge.s32.totalorder %s30, 1
      %s32 = scalar_select %p31, 0, %s30
      %s33 = sadd.s32 1, %s24
      %s34 = scalar_select %p31, %s33, %s24
      %p35 = scmp.ge.s32.totalorder %s34, 2
      %s36 = scalar_select %p35, 0, %s34
      %s37 = sadd.s32 %s24, %s25
      %p38 = scmp.lt.s32.totalorder %s37, 1
      %s39 = scalar_select %p38, %s37, 1
      %s40 = sadd.s32 %s36, %s32
      %p41 = scmp.lt.s32.totalorder %s40, 1
      %s42 = scalar_select %p41, %s40, 1
      %s43 = ssub.s32 %s39, %s42
      %p44 = scmp.eq.s32.totalorder %s43, 0
      %s46 = sadd.s32 %s45, 1
      %s47 = scalar_select %p44, %s45, %s46
      %p50 = pneg %p44
      %p51 = scmp.eq.s32.totalorder %s17, 1
      %p52 = por %p50, %p51
      %p53 = scmp.ne.s32.totalorder %s45, %s48
      %p54 = scmp.eq.s32.totalorder %s17, 0
      %p55 = por %p53, %p54
      %p56 = scmp.ne.s32.totalorder %s45, %s48
      %p57 = scmp.eq.s32.totalorder %s22, 1
      %p58 = por %p56, %p57
      %p59 = scmp.ne.s32.totalorder %s48, %s49
      %p60 = scmp.eq.s32.totalorder %s22, 0
      %p61 = por %p59, %p60
      %p62 = scmp.ne.s32.totalorder %s48, %s49
      %p63 = scmp.eq.s32.totalorder %s23, 1
      %p64 = por %p62, %p63
      %p66 = scmp.ne.s32.totalorder %s49, %s65
      %p67 = scmp.eq.s32.totalorder %s23, 0
      %p68 = por %p66, %p67
      %s69 = sadd.s32 %s24, %s25
      %p70 = scmp.lt.s32.totalorder %s69, 1
      %s71 = scalar_select %p70, %s69, 1
      %s72 = sadd.s32 %s36, %s32
      %p73 = scmp.lt.s32.totalorder %s72, 1
      %s74 = scalar_select %p73, %s72, 1
      %s75 = ssub.s32 %s71, %s74
      %p76 = scmp.eq.s32.totalorder %s75, 0
      %s78 = sadd.s32 %s77, 1
      %s79 = scalar_select %p76, %s77, %s78
      %p82 = pneg %p76
      %p83 = scmp.eq.s32.totalorder %s17, 1
      %p84 = por %p82, %p83
      %p85 = scmp.ne.s32.totalorder %s77, %s80
      %p86 = scmp.eq.s32.totalorder %s17, 0
      %p87 = por %p85, %p86
      %p88 = scmp.ne.s32.totalorder %s77, %s80
      %p89 = scmp.eq.s32.totalorder %s22, 1
      %p90 = por %p88, %p89
      %p91 = scmp.ne.s32.totalorder %s80, %s81
      %p92 = scmp.eq.s32.totalorder %s22, 0
      %p93 = por %p91, %p92
      %p94 = scmp.ne.s32.totalorder %s80, %s81
      %p95 = scmp.eq.s32.totalorder %s23, 1
      %p96 = por %p94, %p95
      %p98 = scmp.ne.s32.totalorder %s81, %s97
      %p99 = scmp.eq.s32.totalorder %s23, 0
      %p100 = por %p98, %p99
      %s101 = ssub.s32 %s24, %s36
      %p102 = scmp.eq.s32.totalorder %s101, 0
      %s104 = sadd.s32 %s103, 1
      %s105 = scalar_select %p102, %s103, %s104
      %p108 = pneg %p102
      %p109 = scmp.eq.s32.totalorder %s17, 1
      %p110 = por %p108, %p109
      %p111 = scmp.ne.s32.totalorder %s103, %s106
      %p112 = scmp.eq.s32.totalorder %s17, 0
      %p113 = por %p111, %p112
      %p114 = scmp.ne.s32.totalorder %s103, %s106
      %p115 = scmp.eq.s32.totalorder %s22, 1
      %p116 = por %p114, %p115
      %p117 = scmp.ne.s32.totalorder %s106, %s107
      %p118 = scmp.eq.s32.totalorder %s22, 0
      %p119 = por %p117, %p118
      %p120 = scmp.ne.s32.totalorder %s106, %s107
      %p121 = scmp.eq.s32.totalorder %s23, 1
      %p122 = por %p120, %p121
      %p124 = scmp.ne.s32.totalorder %s107, %s123
      %p125 = scmp.eq.s32.totalorder %s23, 0
      %p126 = por %p124, %p125
      %p127 = scmp.le.s32.totalorder 1, %s17
      %p128 = scmp.lt.s32.totalorder %s17, 3
      %p129 = pnand %p127, %p128
      %p130 = pneg %p129
      // Predicated region
      $region9: #{tpu_custom_call.1} parent=5 // pred_check
        _
      $region10: #{tpu_custom_call.1} parent=5 // pred_check_branch
        %132 = sbr.rel (%p129) target = $region12
      $region11: #{tpu_custom_call.1} parent=5 // pred_region
        %s133 = ssub.s32 %s17, 1
      $region12: #{tpu_custom_call.1} parent=5 // pred_fallthru
        _
      %p134 = scmp.lt.s32.totalorder %s17, 2
      // Predicated region
      $region13: #{tpu_custom_call.1} parent=5 // pred_check
        %p135 = pneg %p134
      $region14: #{tpu_custom_call.1} parent=5 // pred_check_branch
        %137 = sbr.rel (%p135) target = $region16
      $region15: #{tpu_custom_call.1} parent=5 // pred_region
        // Predicated region
        $region17: #{tpu_custom_call.1} parent=15 // pred_check
          %p138 = pneg %p55
        $region18: #{tpu_custom_call.1} parent=15 // pred_check_branch
          %140 = sbr.rel (%p138) target = $region20
        $region19: #{tpu_custom_call.1} parent=15 // pred_region
          %s141 = sand.u32 %s45, 1
          %s142 = scalar_lea.sflag [#allocation4], %s141
          %s143 = sand.u32 %s45, 1
          %s144 = smul.addr %s143, 8
          %s145 = scalar_lea.vmem [#allocation3], %s144
          %s146 = sadd.s32 %s24, %s25
          %p147 = scmp.lt.s32.totalorder %s146, 1
          %s148 = scalar_select %p147, %s146, 1
          %s150 = ssub.s32 128, 128
          %151 = vsyncadd %s142, %s150
          %s152 = smul.addr %s148, 128
          %s153 = scalar_lea.hbm %s0, %s152
          %s155 = sshll.u32 %s145, 4
          %s156 = int_to_ptr.vmem [resolvable:$true] %s155
          %158 = dma.hbm_to_vmem [thread:$0]  %s153, 128, %s156, %s142
        $region20: #{tpu_custom_call.1} parent=15 // pred_fallthru
          _
        // Predicated region
        $region21: #{tpu_custom_call.1} parent=15 // pred_check
          %p159 = pneg %p87
        $region22: #{tpu_custom_call.1} parent=15 // pred_check_branch
          %161 = sbr.rel (%p159) target = $region24
        $region23: #{tpu_custom_call.1} parent=15 // pred_region
          %s162 = sand.u32 %s77, 1
          %s163 = scalar_lea.sflag [#allocation7], %s162
          %s164 = sand.u32 %s77, 1
          %s165 = smul.addr %s164, 8
          %s166 = scalar_lea.vmem [#allocation6], %s165
          %s167 = sadd.s32 %s24, %s25
          %p168 = scmp.lt.s32.totalorder %s167, 1
          %s169 = scalar_select %p168, %s167, 1
          %s171 = ssub.s32 128, 128
          %172 = vsyncadd %s163, %s171
          %s173 = smul.addr %s169, 128
          %s174 = scalar_lea.hbm %s1, %s173
          %s176 = sshll.u32 %s166, 4
          %s177 = int_to_ptr.vmem [resolvable:$true] %s176
          %179 = dma.hbm_to_vmem [thread:$0]  %s174, 128, %s177, %s163
        $region24: #{tpu_custom_call.1} parent=15 // pred_fallthru
          _
      $region16: #{tpu_custom_call.1} parent=5 // pred_fallthru
        _
      %p180 = scmp.le.s32.totalorder 1, %s17
      %p181 = scmp.lt.s32.totalorder %s17, 3
      %p182 = pnand %p180, %p181
      %p183 = pneg %p182
      // Predicated region
      $region25: #{tpu_custom_call.1} parent=5 // pred_check
        _
      $region26: #{tpu_custom_call.1} parent=5 // pred_check_branch
        %185 = sbr.rel (%p182) target = $region28
      $region27: #{tpu_custom_call.1} parent=5 // pred_region
        %s186 = ssub.s32 %s17, 1
        %s187 = sand.u32 %s48, 1
        %s188 = scalar_lea.sflag [#allocation4], %s187
        %s189 = sand.u32 %s48, 1
        %s190 = smul.addr %s189, 8
        %s191 = scalar_lea.vmem [#allocation3], %s190
        // Predicated region
        $region29: #{tpu_custom_call.1} parent=27 // pred_check
          %p192 = pneg %p61
        $region30: #{tpu_custom_call.1} parent=27 // pred_check_branch
          %194 = sbr.rel (%p192) target = $region32
        $region31: #{tpu_custom_call.1} parent=27 // pred_region
          %195 = dma.done %s188, 128
        $region32: #{tpu_custom_call.1} parent=27 // pred_fallthru
          _
        %s196 = sand.u32 %s80, 1
        %s197 = scalar_lea.sflag [#allocation7], %s196
        %s198 = sand.u32 %s80, 1
        %s199 = smul.addr %s198, 8
        %s200 = scalar_lea.vmem [#allocation6], %s199
        // Predicated region
        $region33: #{tpu_custom_call.1} parent=27 // pred_check
          %p201 = pneg %p93
        $region34: #{tpu_custom_call.1} parent=27 // pred_check_branch
          %203 = sbr.rel (%p201) target = $region36
        $region35: #{tpu_custom_call.1} parent=27 // pred_region
          %204 = dma.done %s197, 128
        $region36: #{tpu_custom_call.1} parent=27 // pred_fallthru
          _
        %s205 = sand.u32 %s48, 1
        %s206 = scalar_lea.sflag [#allocation4], %s205
        %s207 = sand.u32 %s48, 1
        %s208 = smul.addr %s207, 8
        %s209 = scalar_lea.vmem [#allocation3], %s208
        %p210 = pneg %p61
        %p211 = pneg %p58
        %s212 = sand.u32 %s80, 1
        %s213 = scalar_lea.sflag [#allocation7], %s212
        %s214 = sand.u32 %s80, 1
        %s215 = smul.addr %s214, 8
        %s216 = scalar_lea.vmem [#allocation6], %s215
        %p217 = pneg %p93
        %p218 = pneg %p90
        %p219 = pneg %p119
        %p220 = pneg %p116
        %s221 = sand.u32 %s106, 1
        %s222 = scalar_lea.sflag [#allocation5], %s221
        %s223 = sand.u32 %s106, 1
        %s224 = smul.addr %s223, 8
        %s225 = scalar_lea.vmem [#allocation8], %s224
        %s226 = sadd.s32 %s26, %s27
        %p227 = scmp.lt.s32.totalorder %s226, 1
        %s228 = scalar_select %p227, %s226, 1
        %s229 = sadd.s32 %s26, %s27
        %p230 = scmp.lt.s32.totalorder %s229, 1
        %s231 = scalar_select %p230, %s229, 1
        %p232 = scmp.eq.s32.totalorder %s27, 0
        // Predicated region
        $region37: #{tpu_custom_call.1} parent=27 // pred_check
          %p233 = pneg %p232
        $region38: #{tpu_custom_call.1} parent=27 // pred_check_branch
          %235 = sbr.rel (%p233) target = $region40
        $region39: #{tpu_custom_call.1} parent=27 // pred_region
          %vm236 = vcmask 253952
          %237 = vst.msk [vmem:[#allocation2] sm:$0x1] %vm236, 0.0
        $region40: #{tpu_custom_call.1} parent=27 // pred_fallthru
          _
        %v238 = vld [vmem:[%s191] sm:$0xff]
        %v239 = vmul.f32 %v238, 0.33333334
        %v240 = vld [vmem:[%s200] sm:$0xff]
        %v241 = vmul.f32 %v240, 0.33333334
        %vm242 = vcmask 261120
        %v243 = vsel %vm242, %v239, -inf
        %244 = vmax.xlane.f32.xlu0 %v243
        %v245 = vpop.xlane.xlu0 %244
        %v246 = vsub.f32 %v239, %v245
        %v247 = vmul.f32 %v246, 1.442695
        %v248 = vpow.pop %v247
        %v249 = vsel %vm242, %v248, 0.0
        %250 = vadd.xlane.f32.xlu0 %v249
        %v251 = vpop.xlane.xlu0 %250
        %v252 = vrcp.pop %v251
        %v253 = vmul.f32 %v248, %v252
        %v254 = vsel %vm242, %v241, -inf
        %255 = vmax.xlane.f32.xlu0 %v254
        %v256 = vpop.xlane.xlu0 %255
        %v257 = vsub.f32 %v241, %v256
        %v258 = vmul.f32 %v257, 1.442695
        %v259 = vpow.pop %v258
        %v260 = vsel %vm242, %v259, 0.0
        %261 = vadd.xlane.f32.xlu0 %v260
        %v262 = vpop.xlane.xlu0 %261
        %v263 = vrcp.pop %v262
        %v264 = vmul.f32 %v259, %v263
        %v265 = vlog2.pop %v262
        %v266 = vmul.f32 %v265, 0.6931472
        %v267 = vsub.f32 %v257, %v266
        %v268 = vsub.f32 %v267, %v253
        %v269 = vmul.f32 %v264, %v268
        %s270 = sadd.s32 %s26, %s27
        %s271 = sadd.s32 %s270, 1
        %s272 = smul.u32 %s271, 8
        %p273 = scmp.gt.s32.totalorder %s272, 13
        // Predicated region
        $region41: #{tpu_custom_call.1} parent=27 // pred_check
          %p274 = pneg %p273
        $region42: #{tpu_custom_call.1} parent=27 // pred_check_branch
          %276 = sbr.rel (%p274) target = $region44
        $region43: #{tpu_custom_call.1} parent=27 // pred_region
          %s277 = smul.u32 %s270, 8
          %v278 = vlaneseq
          %v279 = vshrl.u32 %v278, 7
          %v280 = vstv %s277
          %v281 = vadd.s32 %v280, %v279
          %vm282 = vcmp.lt.s32.totalorder %v281, 13
          %v283 = vsel %vm282, %v269, 0.0
          %v284 = vld [vmem:[#allocation2] sm:$0x1]
          %v285 = vsel %vm242, %v283, 0.0
          %v286 = vrot.slane %v285, 4
          %v287 = vadd.f32 %v285, %v286
          %v288 = vrot.slane %v287, 2
          %v289 = vadd.f32 %v287, %v288
          %v290 = vrot.slane %v289, 1
          %v291 = vadd.f32 %v289, %v290
          %v292 = vadd.f32 %v284, %v291
          %vm293 = vcmask 253952
          %294 = vst.msk [vmem:[#allocation2] sm:$0x1] %vm293, %v292
        $region44: #{tpu_custom_call.1} parent=27 // pred_fallthru
          _
        %p295 = scmp.le.s32.totalorder %s272, 13
        // Predicated region
        $region45: #{tpu_custom_call.1} parent=27 // pred_check
          %p296 = pneg %p295
        $region46: #{tpu_custom_call.1} parent=27 // pred_check_branch
          %298 = sbr.rel (%p296) target = $region48
        $region47: #{tpu_custom_call.1} parent=27 // pred_region
          %v299 = vld [vmem:[#allocation2] sm:$0x1]
          %v300 = vsel %vm242, %v269, 0.0
          %v301 = vrot.slane %v300, 4
          %v302 = vadd.f32 %v300, %v301
          %v303 = vrot.slane %v302, 2
          %v304 = vadd.f32 %v302, %v303
          %v305 = vrot.slane %v304, 1
          %v306 = vadd.f32 %v304, %v305
          %v307 = vadd.f32 %v299, %v306
          %vm308 = vcmask 253952
          %309 = vst.msk [vmem:[#allocation2] sm:$0x1] %vm308, %v307
        $region48: #{tpu_custom_call.1} parent=27 // pred_fallthru
          _
        // Predicated region
        $region49: #{tpu_custom_call.1} parent=27 // pred_check
          %p310 = pneg %p232
        $region50: #{tpu_custom_call.1} parent=27 // pred_check_branch
          %312 = sbr.rel (%p310) target = $region52
        $region51: #{tpu_custom_call.1} parent=27 // pred_region
          %v313 = vld [vmem:[#allocation2] sm:$0x1]
          %vm314 = vcmask 253952
          %v315 = vsel %vm314, %v313, 0.0
          %316 = vadd.xlane.f32.xlu0 %v315
          %v317 = vpop.xlane.xlu0 %316
          %v318 = vrot.slane %v317, 4
          %v319 = vadd.f32 %v317, %v318
          %v320 = vrot.slane %v319, 2
          %v321 = vadd.f32 %v319, %v320
          %v322 = vrot.slane %v321, 1
          %v323 = vadd.f32 %v321, %v322
          %s324 = vtos %v323
          %s325 = smul.f32 %s324, 0.07692308
          %v326 = vstv %s325
          %327 = vst [vmem:[%s225] sm:$0xff] %v326
        $region52: #{tpu_custom_call.1} parent=27 // pred_fallthru
          _
        %s328 = sand.u32 %s106, 1
        %s329 = scalar_lea.sflag [#allocation5], %s328
        %s330 = sand.u32 %s106, 1
        %s331 = smul.addr %s330, 8
        %s332 = scalar_lea.vmem [#allocation8], %s331
        // Predicated region
        $region53: #{tpu_custom_call.1} parent=27 // pred_check
          %p333 = pneg %p116
        $region54: #{tpu_custom_call.1} parent=27 // pred_check_branch
          %335 = sbr.rel (%p333) target = $region56
        $region55: #{tpu_custom_call.1} parent=27 // pred_region
          %s337 = ssub.s32 128, 128
          %338 = vsyncadd %s329, %s337
          %s339 = smul.addr %s26, 128
          %s340 = scalar_lea.hbm %s2, %s339
          %s342 = sshll.u32 %s332, 4
          %s343 = int_to_ptr.vmem [resolvable:$true] %s342
          %345 = dma.vmem_to_hbm [thread:$0]  %s343, 128, %s340, %s329
        $region56: #{tpu_custom_call.1} parent=27 // pred_fallthru
          _
      $region28: #{tpu_custom_call.1} parent=5 // pred_fallthru
        _
      %p346 = scmp.le.s32.totalorder 2, %s17
      // Predicated region
      $region57: #{tpu_custom_call.1} parent=5 // pred_check
        %p347 = pneg %p346
      $region58: #{tpu_custom_call.1} parent=5 // pred_check_branch
        %349 = sbr.rel (%p347) target = $region60
      $region59: #{tpu_custom_call.1} parent=5 // pred_region
        %s350 = ssub.s32 %s17, 2
        // Predicated region
        $region61: #{tpu_custom_call.1} parent=59 // pred_check
          %p351 = pneg %p122
        $region62: #{tpu_custom_call.1} parent=59 // pred_check_branch
          %353 = sbr.rel (%p351) target = $region64
        $region63: #{tpu_custom_call.1} parent=59 // pred_region
          %s354 = sand.u32 %s107, 1
          %s355 = scalar_lea.sflag [#allocation5], %s354
          %s356 = sand.u32 %s107, 1
          %s357 = smul.addr %s356, 8
          %s358 = scalar_lea.vmem [#allocation8], %s357
          %359 = dma.done %s355, 128
        $region64: #{tpu_custom_call.1} parent=59 // pred_fallthru
          _
      $region60: #{tpu_custom_call.1} parent=5 // pred_fallthru
        _
    $region6: #{tpu_custom_call.1} parent=1 // loop_footer
      %s21 = sadd.s32 1, %s17
    $region7: #{tpu_custom_call.1} parent=1 // loop_footer_branch
      %16 = sbr.rel target = $region3
    $region8: #{tpu_custom_call.1} parent=1 // loop_exit
      _
    %360 = vsyncpa [#allocation4], 1
    %s361 = scalar_lea.sflag [#allocation4], 1
    %362 = vsyncpa %s361, 1
    %363 = vsyncpa [#allocation7], 1
    %s364 = scalar_lea.sflag [#allocation7], 1
    %365 = vsyncpa %s364, 1
    %366 = vsyncpa [#allocation5], 1
    %s367 = scalar_lea.sflag [#allocation5], 1
    %368 = vsyncpa %s367, 1

</llo_original>
